<compile_context>
chip_gen: v7x
topology: tpu7x:2x2x1
jax: 0.10.0
libtpu: 0.0.40
codegen_flags: <defaults>
</compile_context>

<pallas_src>
import functools

import jax
import jax.numpy as jnp
from jax.experimental import pallas as pl
from jax.experimental.pallas import tpu as pltpu

_CE_LANES = 8  # lanes used for cross-entropy / argmax math (n_classes <= 8)


def _round_up(x, m):
    return ((x + m - 1) // m) * m


def seq_baseline_kernel(x_ref, y_ref, w1_ref, b1_ref, w2_ref, b2_ref,
                        wo_ref, bo_ref, logits_ref, stats_ref):
    # ---- MLP learner: two Linear+ReLU layers (bf16 MXU inputs, f32 accum) ----
    # x streamed as raw f32 (E=300); cast to bf16 in-kernel for the MXU.
    x = x_ref[...].astype(jnp.bfloat16)                               # (TN, E)
    h1 = jnp.dot(x, w1_ref[...], preferred_element_type=jnp.float32) + b1_ref[...]
    h1 = jnp.maximum(h1, 0.0)                                         # (TN, H) f32
    h2 = jnp.dot(h1.astype(jnp.bfloat16), w2_ref[...],
                 preferred_element_type=jnp.float32) + b2_ref[...]
    h2 = jnp.maximum(h2, 0.0)                                         # (TN, H) f32

    # ---- Episode output layer -> lane-dense (TN, CP=128) logits, bf16 store ----
    logits = jnp.dot(h2.astype(jnp.bfloat16), wo_ref[...],
                     preferred_element_type=jnp.float32) + bo_ref[...]  # f32
    logits_ref[...] = logits.astype(logits_ref.dtype)                   # bf16

    # ---- Cross-entropy with ignore_index = -1 on an 8-lane slice (f32 math) ----
    # Columns C.._CE_LANES-1 carry a -1e30 bias -> never win max / contribute to LSE.
    lg = logits[:, :_CE_LANES]                                        # (TN, 8) f32
    y = y_ref[...]                                                    # (TN, 1) int32
    m = jnp.max(lg, axis=-1, keepdims=True)                           # (TN, 1)
    lse = m + jnp.log(jnp.sum(jnp.exp(lg - m), axis=-1, keepdims=True))
    col = jax.lax.broadcasted_iota(jnp.int32, lg.shape, 1)            # (TN, 8)
    picked = jnp.sum(jnp.where(col == y, lg, 0.0), axis=-1, keepdims=True)
    valid = (y != -1)
    per_row = jnp.where(valid, lse - picked, 0.0)                     # (TN, 1)

    # ---- Accuracy: first-occurrence argmax via iota+min (pad cols never max) ----
    pred = jnp.min(jnp.where(lg == m, col, _CE_LANES), axis=-1, keepdims=True)
    correct = jnp.where(valid & (pred == y), 1.0, 0.0)                # (TN, 1)

    # ---- In-kernel reduction -> one lane-dense (8, 128) stats row-block per tile ----
    loss_sum = jnp.sum(per_row, keepdims=True)                        # (1, 1)
    valid_cnt = jnp.sum(valid.astype(jnp.float32), keepdims=True)     # (1, 1)
    correct_cnt = jnp.sum(correct, keepdims=True)                     # (1, 1)

    sub = jax.lax.broadcasted_iota(jnp.int32, (8, 128), 0)
    lane = jax.lax.broadcasted_iota(jnp.int32, (8, 128), 1)
    stats = (jnp.where((sub == 0) & (lane == 0), loss_sum, 0.0)
             + jnp.where((sub == 0) & (lane == 1), valid_cnt, 0.0)
             + jnp.where((sub == 0) & (lane == 2), correct_cnt, 0.0))
    stats_ref[...] = stats                                            # (8, 128)


@functools.partial(jax.jit, static_argnames=("tile_n",))
def seq_baseline_forward(batch_x, batch_y, params, tile_n=4096):
    """batch_x: (B, T, E) f32, batch_y: (B, T) int32 (-1 = ignore)."""
    B, T, E = batch_x.shape
    N = B * T
    w1, b1, w2, b2, wo, bo = params
    H = w1.shape[1]
    C = wo.shape[1]
    assert C <= _CE_LANES, "CE math assumes n_classes <= 8"

    CP = 128                                   # lane-dense logits slab width
    TN = _round_up(min(int(tile_n), _round_up(N, 16)), 16)
    NP = _round_up(N, TN)
    num_tiles = NP // TN
    pad_rows = NP - N

    # Only cheap row padding of the token dim; E stays 300 (Mosaic lane-pads in VMEM).
    x_flat = batch_x.reshape(N, E)
    x_in = jnp.pad(x_flat, ((0, pad_rows), (0, 0))) if pad_rows else x_flat
    y_flat = batch_y.reshape(N, 1).astype(jnp.int32)
    y_in = (jnp.pad(y_flat, ((0, pad_rows), (0, 0)), constant_values=-1)
            if pad_rows else y_flat)

    # Tiny weight prep (bf16 stream, f32 biases); padded logit columns get a huge
    # negative bias so LSE / argmax ignore them.
    w1b = w1.astype(jnp.bfloat16)                                         # (E, H)
    w2b = w2.astype(jnp.bfloat16)                                         # (H, H)
    wop = jnp.zeros((H, CP), jnp.bfloat16).at[:, :C].set(wo.astype(jnp.bfloat16))
    b1f = b1.reshape(1, H).astype(jnp.float32)
    b2f = b2.reshape(1, H).astype(jnp.float32)
    bop = jnp.full((1, CP), -1e30, jnp.float32).at[:, :C].set(
        bo.reshape(1, C).astype(jnp.float32))

    const = lambda i: (0, 0)
    tiled = lambda i: (i, 0)

    flops = 2 * NP * (E * H + H * H + H * CP)
    bytes_accessed = (NP * E * 4 + NP * 4                      # x (f32) + y
                      + (E * H + H * H + H * CP) * 2           # weights (bf16)
                      + (2 * H + CP) * 4                        # biases (f32)
                      + NP * CP * 2                             # logits (bf16)
                      + num_tiles * 8 * 128 * 4)                # stats

    logits_p, stats = pl.pallas_call(
        seq_baseline_kernel,
        out_shape=(jax.ShapeDtypeStruct((NP, CP), jnp.bfloat16),
                   jax.ShapeDtypeStruct((num_tiles * 8, 128), jnp.float32)),
        grid=(num_tiles,),
        in_specs=[
            pl.BlockSpec((TN, E), tiled),     # x tile (pipelined, raw f32, E=300)
            pl.BlockSpec((TN, 1), tiled),     # y tile
            pl.BlockSpec((E, H), const),      # w1 (resident, constant index_map)
            pl.BlockSpec((1, H), const),      # b1
            pl.BlockSpec((H, H), const),      # w2
            pl.BlockSpec((1, H), const),      # b2
            pl.BlockSpec((H, CP), const),     # wo (lane-padded)
            pl.BlockSpec((1, CP), const),     # bo (lane-padded, -1e30 pad cols)
        ],
        out_specs=(pl.BlockSpec((TN, CP), tiled),
                   pl.BlockSpec((8, 128), tiled)),
        compiler_params=pltpu.CompilerParams(
            dimension_semantics=("parallel",),
            vmem_limit_bytes=48 * 1024 * 1024),
        cost_estimate=pl.CostEstimate(
            flops=flops,
            transcendentals=NP * _CE_LANES,
            bytes_accessed=bytes_accessed),
    )(x_in, y_in, w1b, b1f, w2b, b2f, wop, bop)

    # Tiny wrapper glue: sum per-tile partial stats (padded rows carry y=-1 -> 0).
    totals = jnp.sum(stats, axis=0)                        # (128,)
    n_valid = jnp.maximum(totals[1], 1.0)
    loss = totals[0] / n_valid
    accuracy = totals[2] / n_valid
    logits = logits_p[:N, :C].astype(jnp.float32)
    return logits, loss, accuracy


def init_params(key, embed_dim, hidden, n_classes):
    """Deterministic nn.Linear-style init: U(-1/sqrt(fan_in), 1/sqrt(fan_in))."""
    ks = jax.random.split(key, 6)

    def lin(kw, kb, fan_in, fan_out):
        bound = 1.0 / jnp.sqrt(float(fan_in))
        w = jax.random.uniform(kw, (fan_in, fan_out), jnp.float32, -bound, bound)
        b = jax.random.uniform(kb, (1, fan_out), jnp.float32, -bound, bound)
        return w, b

    w1, b1 = lin(ks[0], ks[1], embed_dim, hidden)
    w2, b2 = lin(ks[2], ks[3], hidden, hidden)
    wo, bo = lin(ks[4], ks[5], hidden, n_classes)
    return (w1, b1, w2, b2, wo, bo)


if __name__ == "__main__":
    key = jax.random.PRNGKey(0)
    k_x, k_y, k_p = jax.random.split(key, 3)

    B, T, E = 2, 8, 300        # batch of 2 sentences, seq len 8, GloVe-300 dim
    H, C = 32, 5               # learner hidden size, episode n_classes

    batch_x = jax.random.normal(k_x, (B, T, E), dtype=jnp.float32)
    batch_y = jax.random.randint(k_y, (B, T), 0, C).astype(jnp.int32)
    # Simulate padded / ignored positions (ignore_index = -1).
    batch_y = batch_y.at[0, T - 1].set(-1).at[1, T - 2].set(-1)

    params = init_params(k_p, E, H, C)

    logits, loss, acc = seq_baseline_forward(batch_x, batch_y, params)
    jax.block_until_ready((logits, loss, acc))

    assert logits.shape == (B * T, C)
    assert bool(jnp.isfinite(loss))
    assert bool(jnp.isfinite(acc))
    print("KERNEL_OK")
</pallas_src>

<mosaic_0001>
module attributes {stable_mosaic.version = 11 : i64} {
  func.func @seq_baseline_kernel(%arg0: i32, %arg1: memref<16x300xf32, #tpu.memory_space<vmem>>, %arg2: memref<16x1xi32, #tpu.memory_space<vmem>>, %arg3: memref<300x32xbf16, #tpu.memory_space<vmem>>, %arg4: memref<1x32xf32, #tpu.memory_space<vmem>>, %arg5: memref<32x32xbf16, #tpu.memory_space<vmem>>, %arg6: memref<1x32xf32, #tpu.memory_space<vmem>>, %arg7: memref<32x128xbf16, #tpu.memory_space<vmem>>, %arg8: memref<1x128xf32, #tpu.memory_space<vmem>>, %arg9: memref<16x128xbf16, #tpu.memory_space<vmem>>, %arg10: memref<8x128xf32, #tpu.memory_space<vmem>>) attributes {dimension_semantics = [#tpu.dimension_semantics<parallel>], iteration_bounds = array<i64: 1>, scalar_prefetch = 0 : i64, scratch_operands = 0 : i64, tpu.core_type = #tpu.core_type<tc>, window_params = [{transform_indices = @transform_0, window_bounds = array<i64: 16, 300>}, {transform_indices = @transform_1, window_bounds = array<i64: 16, 1>}, {pipeline_mode = #tpu.pipeline_mode<synchronous>, transform_indices = @transform_2, window_bounds = array<i64: 300, 32>}, {pipeline_mode = #tpu.pipeline_mode<synchronous>, transform_indices = @transform_3, window_bounds = array<i64: 1, 32>}, {pipeline_mode = #tpu.pipeline_mode<synchronous>, transform_indices = @transform_4, window_bounds = array<i64: 32, 32>}, {pipeline_mode = #tpu.pipeline_mode<synchronous>, transform_indices = @transform_5, window_bounds = array<i64: 1, 32>}, {pipeline_mode = #tpu.pipeline_mode<synchronous>, transform_indices = @transform_6, window_bounds = array<i64: 32, 128>}, {pipeline_mode = #tpu.pipeline_mode<synchronous>, transform_indices = @transform_7, window_bounds = array<i64: 1, 128>}, {transform_indices = @transform_8, window_bounds = array<i64: 16, 128>}, {transform_indices = @transform_9, window_bounds = array<i64: 8, 128>}]} {
    %c0 = arith.constant 0 : index
    %c0_0 = arith.constant 0 : index
    %0 = vector.load %arg1[%c0, %c0_0] : memref<16x300xf32, #tpu.memory_space<vmem>>, vector<16x300xf32>
    %1 = arith.truncf %0 : vector<16x300xf32> to vector<16x300xbf16>
    %c0_1 = arith.constant 0 : index
    %c0_2 = arith.constant 0 : index
    %2 = vector.load %arg3[%c0_1, %c0_2] : memref<300x32xbf16, #tpu.memory_space<vmem>>, vector<300x32xbf16>
    %cst = arith.constant dense<0.000000e+00> : vector<16x32xf32>
    %3 = tpu.matmul %1, %2, %cst {dimension_numbers = #tpu.dot_dimension_numbers<[1], [0], [0], [1], [0, 0, 1, 1], [], []>} : vector<16x300xbf16>, vector<300x32xbf16>, vector<16x32xf32> -> vector<16x32xf32>
    %c0_3 = arith.constant 0 : index
    %c0_4 = arith.constant 0 : index
    %4 = vector.load %arg4[%c0_3, %c0_4] : memref<1x32xf32, #tpu.memory_space<vmem>>, vector<1x32xf32>
    %5 = vector.broadcast %4 : vector<1x32xf32> to vector<16x32xf32>
    %6 = arith.addf %3, %5 : vector<16x32xf32>
    %cst_5 = arith.constant 0.000000e+00 : f32
    %7 = vector.broadcast %cst_5 : f32 to vector<16x32xf32>
    %8 = arith.maximumf %6, %7 : vector<16x32xf32>
    %9 = arith.truncf %8 : vector<16x32xf32> to vector<16x32xbf16>
    %c0_6 = arith.constant 0 : index
    %c0_7 = arith.constant 0 : index
    %10 = vector.load %arg5[%c0_6, %c0_7] : memref<32x32xbf16, #tpu.memory_space<vmem>>, vector<32x32xbf16>
    %cst_8 = arith.constant dense<0.000000e+00> : vector<16x32xf32>
    %11 = tpu.matmul %9, %10, %cst_8 {dimension_numbers = #tpu.dot_dimension_numbers<[1], [0], [0], [1], [0, 0, 1, 1], [], []>} : vector<16x32xbf16>, vector<32x32xbf16>, vector<16x32xf32> -> vector<16x32xf32>
    %c0_9 = arith.constant 0 : index
    %c0_10 = arith.constant 0 : index
    %12 = vector.load %arg6[%c0_9, %c0_10] : memref<1x32xf32, #tpu.memory_space<vmem>>, vector<1x32xf32>
    %13 = vector.broadcast %12 : vector<1x32xf32> to vector<16x32xf32>
    %14 = arith.addf %11, %13 : vector<16x32xf32>
    %cst_11 = arith.constant 0.000000e+00 : f32
    %15 = vector.broadcast %cst_11 : f32 to vector<16x32xf32>
    %16 = arith.maximumf %14, %15 : vector<16x32xf32>
    %17 = arith.truncf %16 : vector<16x32xf32> to vector<16x32xbf16>
    %c0_12 = arith.constant 0 : index
    %c0_13 = arith.constant 0 : index
    %18 = vector.load %arg7[%c0_12, %c0_13] : memref<32x128xbf16, #tpu.memory_space<vmem>>, vector<32x128xbf16>
    %cst_14 = arith.constant dense<0.000000e+00> : vector<16x128xf32>
    %19 = tpu.matmul %17, %18, %cst_14 {dimension_numbers = #tpu.dot_dimension_numbers<[1], [0], [0], [1], [0, 0, 1, 1], [], []>} : vector<16x32xbf16>, vector<32x128xbf16>, vector<16x128xf32> -> vector<16x128xf32>
    %c0_15 = arith.constant 0 : index
    %c0_16 = arith.constant 0 : index
    %20 = vector.load %arg8[%c0_15, %c0_16] : memref<1x128xf32, #tpu.memory_space<vmem>>, vector<1x128xf32>
    %21 = vector.broadcast %20 : vector<1x128xf32> to vector<16x128xf32>
    %22 = arith.addf %19, %21 : vector<16x128xf32>
    %23 = arith.truncf %22 : vector<16x128xf32> to vector<16x128xbf16>
    %c0_17 = arith.constant 0 : index
    %c0_18 = arith.constant 0 : index
    %24 = vector.load %arg9[%c0_17, %c0_18] : memref<16x128xbf16, #tpu.memory_space<vmem>>, vector<16x128xbf16>
    tpu.vector_store %arg9[%c0_17, %c0_18], %23 {strides = array<i32>} : memref<16x128xbf16, #tpu.memory_space<vmem>>, vector<16x128xbf16>,
    %25 = vector.extract_strided_slice %22 {offsets = [0, 0], sizes = [16, 8], strides = [1, 1]} : vector<16x128xf32> to vector<16x8xf32>
    %c0_19 = arith.constant 0 : index
    %c0_20 = arith.constant 0 : index
    %26 = vector.load %arg2[%c0_19, %c0_20] : memref<16x1xi32, #tpu.memory_space<vmem>>, vector<16x1xi32>
    %cst_21 = arith.constant dense<0xFF800000> : vector<16xf32>
    %27 = vector.multi_reduction <maximumf>, %25, %cst_21 [1] : vector<16x8xf32> to vector<16xf32>
    %28 = vector.shape_cast %27 : vector<16xf32> to vector<16x1xf32>
    %29 = vector.broadcast %28 : vector<16x1xf32> to vector<16x8xf32>
    %30 = arith.subf %25, %29 : vector<16x8xf32>
    %31 = math.exp %30 : vector<16x8xf32>
    %cst_22 = arith.constant dense<0.000000e+00> : vector<16xf32>
    %32 = vector.multi_reduction <add>, %31, %cst_22 [1] : vector<16x8xf32> to vector<16xf32>
    %33 = vector.shape_cast %32 : vector<16xf32> to vector<16x1xf32>
    %34 = math.log %33 : vector<16x1xf32>
    %35 = arith.addf %28, %34 : vector<16x1xf32>
    %36 = tpu.iota {dimensions = array<i32: 1>} : vector<16x8xi32>
    %37 = vector.broadcast %26 : vector<16x1xi32> to vector<16x8xi32>
    %38 = arith.cmpi eq, %36, %37 : vector<16x8xi32>
    %cst_23 = arith.constant 0.000000e+00 : f32
    %39 = vector.broadcast %cst_23 : f32 to vector<16x8xf32>
    %40 = arith.select %38, %25, %39 : vector<16x8xi1>, vector<16x8xf32>
    %cst_24 = arith.constant dense<0.000000e+00> : vector<16xf32>
    %41 = vector.multi_reduction <add>, %40, %cst_24 [1] : vector<16x8xf32> to vector<16xf32>
    %42 = vector.shape_cast %41 : vector<16xf32> to vector<16x1xf32>
    %c-1_i32 = arith.constant -1 : i32
    %43 = vector.broadcast %c-1_i32 : i32 to vector<16x1xi32>
    %44 = arith.cmpi ne, %26, %43 : vector<16x1xi32>
    %45 = arith.subf %35, %42 : vector<16x1xf32>
    %cst_25 = arith.constant 0.000000e+00 : f32
    %46 = vector.broadcast %cst_25 : f32 to vector<16x1xf32>
    %47 = arith.select %44, %45, %46 : vector<16x1xi1>, vector<16x1xf32>
    %48 = vector.broadcast %28 : vector<16x1xf32> to vector<16x8xf32>
    %49 = arith.cmpf oeq, %25, %48 : vector<16x8xf32>
    %c8_i32 = arith.constant 8 : i32
    %50 = vector.broadcast %c8_i32 : i32 to vector<16x8xi32>
    %51 = arith.select %49, %36, %50 : vector<16x8xi1>, vector<16x8xi32>
    %cst_26 = arith.constant dense<2147483647> : vector<16xi32>
    %52 = vector.multi_reduction <minsi>, %51, %cst_26 [1] : vector<16x8xi32> to vector<16xi32>
    %53 = vector.shape_cast %52 : vector<16xi32> to vector<16x1xi32>
    %54 = arith.cmpi eq, %53, %26 : vector<16x1xi32>
    %55 = arith.andi %44, %54 : vector<16x1xi1>
    %cst_27 = arith.constant 1.000000e+00 : f32
    %cst_28 = arith.constant 0.000000e+00 : f32
    %56 = vector.broadcast %cst_27 : f32 to vector<16x1xf32>
    %57 = vector.broadcast %cst_28 : f32 to vector<16x1xf32>
    %58 = arith.select %55, %56, %57 : vector<16x1xi1>, vector<16x1xf32>
    %59 = vector.shape_cast %47 : vector<16x1xf32> to vector<1x16x1xf32>
    %cst_29 = arith.constant dense<0.000000e+00> : vector<1xf32>
    %60 = vector.multi_reduction <add>, %59, %cst_29 [1, 2] : vector<1x16x1xf32> to vector<1xf32>
    %61 = vector.shape_cast %60 : vector<1xf32> to vector<1x1x1xf32>
    %62 = vector.extract %61[0, 0, 0] : f32 from vector<1x1x1xf32>
    %63 = vector.broadcast %62 : f32 to vector<1x1xf32>
    %64 = arith.extui %44 : vector<16x1xi1> to vector<16x1xi32>
    %65 = arith.sitofp %64 : vector<16x1xi32> to vector<16x1xf32>
    %66 = vector.shape_cast %65 : vector<16x1xf32> to vector<1x16x1xf32>
    %cst_30 = arith.constant dense<0.000000e+00> : vector<1xf32>
    %67 = vector.multi_reduction <add>, %66, %cst_30 [1, 2] : vector<1x16x1xf32> to vector<1xf32>
    %68 = vector.shape_cast %67 : vector<1xf32> to vector<1x1x1xf32>
    %69 = vector.extract %68[0, 0, 0] : f32 from vector<1x1x1xf32>
    %70 = vector.broadcast %69 : f32 to vector<1x1xf32>
    %71 = vector.shape_cast %58 : vector<16x1xf32> to vector<1x16x1xf32>
    %cst_31 = arith.constant dense<0.000000e+00> : vector<1xf32>
    %72 = vector.multi_reduction <add>, %71, %cst_31 [1, 2] : vector<1x16x1xf32> to vector<1xf32>
    %73 = vector.shape_cast %72 : vector<1xf32> to vector<1x1x1xf32>
    %74 = vector.extract %73[0, 0, 0] : f32 from vector<1x1x1xf32>
    %75 = vector.broadcast %74 : f32 to vector<1x1xf32>
    %76 = tpu.iota {dimensions = array<i32: 0>} : vector<8x128xi32>
    %77 = tpu.iota {dimensions = array<i32: 1>} : vector<8x128xi32>
    %c0_i32 = arith.constant 0 : i32
    %78 = vector.broadcast %c0_i32 : i32 to vector<8x128xi32>
    %79 = arith.cmpi eq, %76, %78 : vector<8x128xi32>
    %c0_i32_32 = arith.constant 0 : i32
    %80 = vector.broadcast %c0_i32_32 : i32 to vector<8x128xi32>
    %81 = arith.cmpi eq, %77, %80 : vector<8x128xi32>
    %82 = arith.andi %79, %81 : vector<8x128xi1>
    %cst_33 = arith.constant 0.000000e+00 : f32
    %83 = vector.shape_cast %63 : vector<1x1xf32> to vector<1x1xf32>
    %84 = vector.broadcast %83 : vector<1x1xf32> to vector<8x128xf32>
    %85 = vector.broadcast %cst_33 : f32 to vector<8x128xf32>
    %86 = arith.select %82, %84, %85 : vector<8x128xi1>, vector<8x128xf32>
    %c0_i32_34 = arith.constant 0 : i32
    %87 = vector.broadcast %c0_i32_34 : i32 to vector<8x128xi32>
    %88 = arith.cmpi eq, %76, %87 : vector<8x128xi32>
    %c1_i32 = arith.constant 1 : i32
    %89 = vector.broadcast %c1_i32 : i32 to vector<8x128xi32>
    %90 = arith.cmpi eq, %77, %89 : vector<8x128xi32>
    %91 = arith.andi %88, %90 : vector<8x128xi1>
    %cst_35 = arith.constant 0.000000e+00 : f32
    %92 = vector.shape_cast %70 : vector<1x1xf32> to vector<1x1xf32>
    %93 = vector.broadcast %92 : vector<1x1xf32> to vector<8x128xf32>
    %94 = vector.broadcast %cst_35 : f32 to vector<8x128xf32>
    %95 = arith.select %91, %93, %94 : vector<8x128xi1>, vector<8x128xf32>
    %96 = arith.addf %86, %95 : vector<8x128xf32>
    %c0_i32_36 = arith.constant 0 : i32
    %97 = vector.broadcast %c0_i32_36 : i32 to vector<8x128xi32>
    %98 = arith.cmpi eq, %76, %97 : vector<8x128xi32>
    %c2_i32 = arith.constant 2 : i32
    %99 = vector.broadcast %c2_i32 : i32 to vector<8x128xi32>
    %100 = arith.cmpi eq, %77, %99 : vector<8x128xi32>
    %101 = arith.andi %98, %100 : vector<8x128xi1>
    %cst_37 = arith.constant 0.000000e+00 : f32
    %102 = vector.shape_cast %75 : vector<1x1xf32> to vector<1x1xf32>
    %103 = vector.broadcast %102 : vector<1x1xf32> to vector<8x128xf32>
    %104 = vector.broadcast %cst_37 : f32 to vector<8x128xf32>
    %105 = arith.select %101, %103, %104 : vector<8x128xi1>, vector<8x128xf32>
    %106 = arith.addf %96, %105 : vector<8x128xf32>
    %c0_38 = arith.constant 0 : index
    %c0_39 = arith.constant 0 : index
    %107 = vector.load %arg10[%c0_38, %c0_39] : memref<8x128xf32, #tpu.memory_space<vmem>>, vector<8x128xf32>
    tpu.vector_store %arg10[%c0_38, %c0_39], %106 {strides = array<i32>} : memref<8x128xf32, #tpu.memory_space<vmem>>, vector<8x128xf32>,
    return
  }
  func.func @transform_0(%arg0: i32) -> (i32, i32) {
    %c0_i32 = arith.constant 0 : i32
    %c0_i32_0 = arith.constant 0 : i32
    return %arg0, %c0_i32 : i32, i32
  }
  func.func @transform_1(%arg0: i32) -> (i32, i32) {
    %c0_i32 = arith.constant 0 : i32
    %c0_i32_0 = arith.constant 0 : i32
    return %arg0, %c0_i32 : i32, i32
  }
  func.func @transform_2(%arg0: i32) -> (i32, i32) {
    %c0_i32 = arith.constant 0 : i32
    %c0_i32_0 = arith.constant 0 : i32
    %c0_i32_1 = arith.constant 0 : i32
    return %c0_i32, %c0_i32_0 : i32, i32
  }
  func.func @transform_3(%arg0: i32) -> (i32, i32) {
    %c0_i32 = arith.constant 0 : i32
    %c0_i32_0 = arith.constant 0 : i32
    %c0_i32_1 = arith.constant 0 : i32
    return %c0_i32, %c0_i32_0 : i32, i32
  }
  func.func @transform_4(%arg0: i32) -> (i32, i32) {
    %c0_i32 = arith.constant 0 : i32
    %c0_i32_0 = arith.constant 0 : i32
    %c0_i32_1 = arith.constant 0 : i32
    return %c0_i32, %c0_i32_0 : i32, i32
  }
  func.func @transform_5(%arg0: i32) -> (i32, i32) {
    %c0_i32 = arith.constant 0 : i32
    %c0_i32_0 = arith.constant 0 : i32
    %c0_i32_1 = arith.constant 0 : i32
    return %c0_i32, %c0_i32_0 : i32, i32
  }
  func.func @transform_6(%arg0: i32) -> (i32, i32) {
    %c0_i32 = arith.constant 0 : i32
    %c0_i32_0 = arith.constant 0 : i32
    %c0_i32_1 = arith.constant 0 : i32
    return %c0_i32, %c0_i32_0 : i32, i32
  }
  func.func @transform_7(%arg0: i32) -> (i32, i32) {
    %c0_i32 = arith.constant 0 : i32
    %c0_i32_0 = arith.constant 0 : i32
    %c0_i32_1 = arith.constant 0 : i32
    return %c0_i32, %c0_i32_0 : i32, i32
  }
  func.func @transform_8(%arg0: i32) -> (i32, i32) {
    %c0_i32 = arith.constant 0 : i32
    %c0_i32_0 = arith.constant 0 : i32
    return %arg0, %c0_i32 : i32, i32
  }
  func.func @transform_9(%arg0: i32) -> (i32, i32) {
    %c0_i32 = arith.constant 0 : i32
    %c0_i32_0 = arith.constant 0 : i32
    return %arg0, %c0_i32 : i32, i32
  }
}

</mosaic_0001>

<llo_original>
// kernel: seq_baseline_forward.1
$region0: #{seq_baseline_forward.1}
  #allocation0 [shape = 'u32[]', space=smem, size = 0x4, offset = 0x4, fixed_abs, tag = 'smem constant byte address 0x4 - core index']
  #allocation1 [shape = 'u32[144,128]{1,0:T(1,128)}', space=vmem, size = 0x12000, scoped, tag = 'internal scratch']
  %s0 = inlined_call_operand.vmem [shape: f32[16,300], index: 0, kind: input, shape index: {}]
  %s1 = inlined_call_operand.vmem [shape: s32[16,1], index: 1, kind: input, shape index: {}]
  %s2 = inlined_call_operand.vmem [shape: bf16[300,32], index: 2, kind: input, shape index: {}]
  %s3 = inlined_call_operand.vmem [shape: f32[1,32], index: 3, kind: input, shape index: {}]
  %s4 = inlined_call_operand.vmem [shape: bf16[32,32], index: 4, kind: input, shape index: {}]
  %s5 = inlined_call_operand.vmem [shape: f32[1,32], index: 5, kind: input, shape index: {}]
  %s6 = inlined_call_operand.vmem [shape: bf16[32,128], index: 6, kind: input, shape index: {}]
  %s7 = inlined_call_operand.vmem [shape: f32[1,128], index: 7, kind: input, shape index: {}]
  %s8 = inlined_call_operand.vmem [shape: bf16[16,128], index: 8, kind: output, shape index: {0}]
  %s9 = inlined_call_operand.vmem [shape: f32[8,128], index: 9, kind: output, shape index: {1}]
  %10 = xla_tuple %s8, %s9
  %s11 = sld [smem:[#allocation0]]
  $region50: #{seq_baseline_forward.1} parent=0
    _
  %s13 = ssub.s32 1, %s11
  %s14 = scalar_select 0, %s13, %s11
  // Predicated region
  $region2: #{seq_baseline_forward.1} parent=0 // pred_check
    _
  $region3: #{seq_baseline_forward.1} parent=0 // pred_check_branch
    %16 = sbr.rel (0) target = $region5
  $region4: #{seq_baseline_forward.1} parent=0 // pred_region
    _
  $region5: #{seq_baseline_forward.1} parent=0 // pred_fallthru
    _
  // Predicated region
  $region6: #{seq_baseline_forward.1} parent=0 // pred_check
    _
  $region7: #{seq_baseline_forward.1} parent=0 // pred_check_branch
    %18 = sbr.rel (0) target = $region9
  $region8: #{seq_baseline_forward.1} parent=0 // pred_region
    _
  $region9: #{seq_baseline_forward.1} parent=0 // pred_fallthru
    _
  // Predicated region
  $region10: #{seq_baseline_forward.1} parent=0 // pred_check
    _
  $region11: #{seq_baseline_forward.1} parent=0 // pred_check_branch
    %20 = sbr.rel (0) target = $region13
  $region12: #{seq_baseline_forward.1} parent=0 // pred_region
    _
  $region13: #{seq_baseline_forward.1} parent=0 // pred_fallthru
    _
  // Predicated region
  $region14: #{seq_baseline_forward.1} parent=0 // pred_check
    _
  $region15: #{seq_baseline_forward.1} parent=0 // pred_check_branch
    %22 = sbr.rel (0) target = $region17
  $region16: #{seq_baseline_forward.1} parent=0 // pred_region
    _
  $region17: #{seq_baseline_forward.1} parent=0 // pred_fallthru
    _
  // Predicated region
  $region18: #{seq_baseline_forward.1} parent=0 // pred_check
    _
  $region19: #{seq_baseline_forward.1} parent=0 // pred_check_branch
    %24 = sbr.rel (0) target = $region21
  $region20: #{seq_baseline_forward.1} parent=0 // pred_region
    _
  $region21: #{seq_baseline_forward.1} parent=0 // pred_fallthru
    _
  // Predicated region
  $region22: #{seq_baseline_forward.1} parent=0 // pred_check
    _
  $region23: #{seq_baseline_forward.1} parent=0 // pred_check_branch
    %26 = sbr.rel (0) target = $region25
  $region24: #{seq_baseline_forward.1} parent=0 // pred_region
    _
  $region25: #{seq_baseline_forward.1} parent=0 // pred_fallthru
    _
  // Predicated region
  $region26: #{seq_baseline_forward.1} parent=0 // pred_check
    _
  $region27: #{seq_baseline_forward.1} parent=0 // pred_check_branch
    %28 = sbr.rel (0) target = $region29
  $region28: #{seq_baseline_forward.1} parent=0 // pred_region
    _
  $region29: #{seq_baseline_forward.1} parent=0 // pred_fallthru
    _
  // Predicated region
  $region30: #{seq_baseline_forward.1} parent=0 // pred_check
    _
  $region31: #{seq_baseline_forward.1} parent=0 // pred_check_branch
    %30 = sbr.rel (0) target = $region33
  $region32: #{seq_baseline_forward.1} parent=0 // pred_region
    _
  $region33: #{seq_baseline_forward.1} parent=0 // pred_fallthru
    _
  %v32 = vld [vmem:[%s0] sm:$0xff]
  %v33 = vld [vmem:[%s0 + $0x8] sm:$0xff]
  %v34 = vld [vmem:[%s0 + $0x10] sm:$0xff]
  %v35 = vld [vmem:[%s0 + $0x18] sm:$0xff]
  %v36 = vld [vmem:[%s0 + $0x20] sm:$0xff]
  %v37 = vld [vmem:[%s0 + $0x28] sm:$0xff]
  %v38 = vpack.c.bf16 %v35, %v32
  %v39 = vpack.c.bf16 %v36, %v33
  %v40 = vpack.c.bf16 %v37, %v34
  %v41 = vld [vmem:[%s2] sm:$0xf]
  %v42 = vld [vmem:[%s2 + $0x4] sm:$0xf]
  %v43 = vld [vmem:[%s2 + $0x8] sm:$0xf]
  %v44 = vld [vmem:[%s2 + $0xc] sm:$0xf]
  %v45 = vld [vmem:[%s2 + $0x10] sm:$0xf]
  %v46 = vld [vmem:[%s2 + $0x14] sm:$0xf]
  %v47 = vld [vmem:[%s2 + $0x18] sm:$0xf]
  %v48 = vld [vmem:[%s2 + $0x1c] sm:$0xf]
  %v49 = vld [vmem:[%s2 + $0x20] sm:$0xf]
  %v50 = vld [vmem:[%s2 + $0x24] sm:$0xf]
  %v51 = vld [vmem:[%s2 + $0x28] sm:$0xf]
  %v52 = vld [vmem:[%s2 + $0x2c] sm:$0xf]
  %v53 = vld [vmem:[%s2 + $0x30] sm:$0xf]
  %v54 = vld [vmem:[%s2 + $0x34] sm:$0xf]
  %v55 = vld [vmem:[%s2 + $0x38] sm:$0xf]
  %v56 = vld [vmem:[%s2 + $0x3c] sm:$0xf]
  %v57 = vld [vmem:[%s2 + $0x40] sm:$0xf]
  %v58 = vld [vmem:[%s2 + $0x44] sm:$0xf]
  %v59 = vld [vmem:[%s2 + $0x48] sm:$0xf]
  %v60 = vld [vmem:[%s2 + $0x4c] sm:$0xf]
  %v61 = vld [vmem:[%s2 + $0x50] sm:$0xf]
  %v62 = vld [vmem:[%s2 + $0x54] sm:$0xf]
  %v63 = vld [vmem:[%s2 + $0x58] sm:$0xf]
  %v64 = vld [vmem:[%s2 + $0x5c] sm:$0xf]
  %v65 = vld [vmem:[%s2 + $0x60] sm:$0xf]
  %v66 = vld [vmem:[%s2 + $0x64] sm:$0xf]
  %v67 = vld [vmem:[%s2 + $0x68] sm:$0xf]
  %v68 = vld [vmem:[%s2 + $0x6c] sm:$0xf]
  %v69 = vld [vmem:[%s2 + $0x70] sm:$0xf]
  %v70 = vld [vmem:[%s2 + $0x74] sm:$0xf]
  %v71 = vld [vmem:[%s2 + $0x78] sm:$0xf]
  %v72 = vld [vmem:[%s2 + $0x7c] sm:$0xf]
  %v73 = vld [vmem:[%s2 + $0x80] sm:$0xf]
  %v74 = vld [vmem:[%s2 + $0x84] sm:$0xf]
  %v75 = vld [vmem:[%s2 + $0x88] sm:$0xf]
  %v76 = vld [vmem:[%s2 + $0x8c] sm:$0xf]
  %v77 = vld [vmem:[%s2 + $0x90] sm:$0xf]
  %v78 = vld [vmem:[%s2 + $0x94] sm:$0x3]
  %v79 = vld [vmem:[%s3] sm:$0x1]
  %v81 = vlaneseq
  %v82 = vshrl.u32 %v81, 7
  %v83 = vsub.s32 0, %v82
  %v84 = vrot.slane %v79, %v83
  %v124 = vunpack.c.l.b16 %v41
  %v125 = vunpack.c.l.b16 %v42
  %v126 = vunpack.c.l.b16 %v43
  %v127 = vunpack.c.l.b16 %v44
  %v128 = vunpack.c.l.b16 %v45
  %v129 = vunpack.c.l.b16 %v46
  %v130 = vunpack.c.l.b16 %v47
  %v131 = vunpack.c.l.b16 %v48
  %v132 = vunpack.c.l.b16 %v49
  %v133 = vunpack.c.l.b16 %v50
  %v134 = vunpack.c.l.b16 %v51
  %v135 = vunpack.c.l.b16 %v52
  %v136 = vunpack.c.l.b16 %v53
  %v137 = vunpack.c.l.b16 %v54
  %v138 = vunpack.c.l.b16 %v55
  %v139 = vunpack.c.l.b16 %v56
  %v140 = vunpack.c.l.b16 %v57
  %v141 = vunpack.c.l.b16 %v58
  %v142 = vunpack.c.l.b16 %v59
  %v143 = vunpack.c.l.b16 %v60
  %v144 = vunpack.c.l.b16 %v61
  %v145 = vunpack.c.l.b16 %v62
  %v146 = vunpack.c.l.b16 %v63
  %v147 = vunpack.c.l.b16 %v64
  %v148 = vunpack.c.l.b16 %v65
  %v149 = vunpack.c.l.b16 %v66
  %v150 = vunpack.c.l.b16 %v67
  %v151 = vunpack.c.l.b16 %v68
  %v152 = vunpack.c.l.b16 %v69
  %v153 = vunpack.c.l.b16 %v70
  %v154 = vunpack.c.l.b16 %v71
  %v155 = vunpack.c.l.b16 %v72
  %v156 = vunpack.c.l.b16 %v73
  %v157 = vunpack.c.l.b16 %v74
  %v158 = vunpack.c.l.b16 %v75
  %v159 = vunpack.c.l.b16 %v76
  %v160 = vunpack.c.l.b16 %v77
  %v161 = vunpack.c.l.b16 %v78
  %v162 = vpack.c.b16 %v125, %v124
  %v163 = vpack.c.b16 %v127, %v126
  %v164 = vpack.c.b16 %v129, %v128
  %v165 = vpack.c.b16 %v131, %v130
  %v166 = vpack.c.b16 %v133, %v132
  %v167 = vpack.c.b16 %v135, %v134
  %v168 = vpack.c.b16 %v137, %v136
  %v169 = vpack.c.b16 %v139, %v138
  %v170 = vpack.c.b16 %v141, %v140
  %v171 = vpack.c.b16 %v143, %v142
  %v172 = vpack.c.b16 %v145, %v144
  %v173 = vpack.c.b16 %v147, %v146
  %v174 = vpack.c.b16 %v149, %v148
  %v175 = vpack.c.b16 %v151, %v150
  %v176 = vpack.c.b16 %v153, %v152
  %v177 = vpack.c.b16 %v155, %v154
  %v178 = vpack.c.b16 %v157, %v156
  %v179 = vpack.c.b16 %v159, %v158
  %v180 = vpack.c.b16 %v161, %v160
  %vm199 = vcmask 359424
  %v201 = vsel %vm199, %v40, 0
  %vm203 = vcmask 1045504
  %v205 = vsel %vm203, %v180, 0
  %207 = vmatprep.subr.bf16.mxu0 0
  %208 = vmatpush1.bf16.msra.mxu0 %v162
  %209 = vmatprep.subr.bf16.mxu0 0
  %210 = vmatpush1.bf16.msra.mxu0 %v163
  %211 = vmatprep.subr.bf16.mxu0 0
  %212 = vmatpush1.bf16.msra.mxu0 %v164
  %213 = vmatprep.subr.bf16.mxu0 0
  %214 = vmatpush1.bf16.msra.mxu0 %v165
  %215 = vmatprep.subr.bf16.mxu0 0
  %216 = vmatpush1.bf16.msra.mxu0 %v166
  %217 = vmatprep.subr.bf16.mxu0 0
  %218 = vmatpush1.bf16.msra.mxu0 %v167
  %219 = vmatprep.subr.bf16.mxu0 0
  %220 = vmatpush1.bf16.msra.mxu0 %v168
  %221 = vmatprep.subr.bf16.mxu0 0
  %222 = vmatpush1.bf16.msra.mxu0 %v169
  %223 = vmatprep.subr.bf16.mxu0 0
  %224 = vmatpush1.bf16.msra.mxu0 %v170
  %225 = vmatprep.subr.bf16.mxu0 0
  %226 = vmatpush1.bf16.msra.mxu0 %v171
  %227 = vmatprep.subr.bf16.mxu0 0
  %228 = vmatpush1.bf16.msra.mxu0 %v172
  %229 = vmatprep.subr.bf16.mxu0 0
  %230 = vmatpush1.bf16.msra.mxu0 %v173
  %231 = vmatprep.subr.bf16.mxu0 0
  %232 = vmatpush1.bf16.msra.mxu0 %v174
  %233 = vmatprep.subr.bf16.mxu0 0
  %234 = vmatpush1.bf16.msra.mxu0 %v175
  %235 = vmatprep.subr.bf16.mxu0 0
  %236 = vmatpush1.bf16.msra.mxu0 %v176
  %237 = vmatprep.subr.bf16.mxu0 0
  %238 = vmatpush1.bf16.msra.mxu0 %v177
  %239 = vmatprep.mubr.bf16.mxu0 %v39
  %240 = vmatmul.mubr.bf16.gmra.mrb[0].mxu0 %v38
  %v241 = vpop.f32.mrb[0].mxu0
  %v242 = vadd.f32 %v84, %v241
  %v243 = vpop.f32.mrb[0].mxu0
  %v244 = vpop.f32.mrb[0].mxu0
  %v245 = vadd.f32 %v84, %v244
  %v246 = vpop.f32.mrb[0].mxu0
  %247 = vdwg.mxu0
  %248 = vmatprep.subr.bf16.mxu0 0
  %249 = vmatpush1.bf16.msra.mxu0 %v178
  %250 = vmatprep.subr.bf16.mxu0 0
  %251 = vmatpush1.bf16.msra.mxu0 %v179
  %252 = vmatprep.subr.bf16.mxu0 0
  %253 = vmatpush1.bf16.msra.mxu0 %v205
  %254 = vmatprep.subr.bf16.mxu0 0
  %255 = vmatpush1.bf16.msra.mxu0 0
  %256 = vmatprep.subr.bf16.mxu0 0
  %257 = vmatpush1.bf16.msra.mxu0 0
  %258 = vmatprep.subr.bf16.mxu0 0
  %259 = vmatpush1.bf16.msra.mxu0 0
  %260 = vmatprep.subr.bf16.mxu0 0
  %261 = vmatpush1.bf16.msra.mxu0 0
  %262 = vmatprep.subr.bf16.mxu0 0
  %263 = vmatpush1.bf16.msra.mxu0 0
  %264 = vmatprep.subr.bf16.mxu0 0
  %265 = vmatpush1.bf16.msra.mxu0 0
  %266 = vmatprep.subr.bf16.mxu0 0
  %267 = vmatpush1.bf16.msra.mxu0 0
  %268 = vmatprep.subr.bf16.mxu0 0
  %269 = vmatpush1.bf16.msra.mxu0 0
  %270 = vmatprep.subr.bf16.mxu0 0
  %271 = vmatpush1.bf16.msra.mxu0 0
  %272 = vmatprep.subr.bf16.mxu0 0
  %273 = vmatpush1.bf16.msra.mxu0 0
  %274 = vmatprep.subr.bf16.mxu0 0
  %275 = vmatpush1.bf16.msra.mxu0 0
  %276 = vmatprep.subr.bf16.mxu0 0
  %277 = vmatpush1.bf16.msra.mxu0 0
  %278 = vmatprep.subr.bf16.mxu0 0
  %279 = vmatpush1.bf16.msra.mxu0 0
  %280 = vmatprep.mubr.bf16.mxu0 0
  %281 = vmatmul.mubr.bf16.gmra.mrb[0].mxu0 %v201
  %v282 = vpop.f32.mrb[0].mxu0
  %v283 = vadd.f32 %v242, %v282
  %v284 = vpop.f32.mrb[0].mxu0
  %v285 = vpop.f32.mrb[0].mxu0
  %v286 = vadd.f32 %v245, %v285
  %v287 = vpop.f32.mrb[0].mxu0
  %288 = vdwg.mxu0
  %v289 = vmax.f32 %v283, 0.0
  %v290 = vmax.f32 %v286, 0.0
  %v291 = vpack.c.bf16 %v290, %v289
  %v292 = vld [vmem:[%s4] sm:$0xf]
  %v293 = vld [vmem:[%s4 + $0x4] sm:$0xf]
  %v294 = vld [vmem:[%s4 + $0x8] sm:$0xf]
  %v295 = vld [vmem:[%s4 + $0xc] sm:$0xf]
  %v296 = vld [vmem:[%s5] sm:$0x1]
  %v298 = vlaneseq
  %v299 = vshrl.u32 %v298, 7
  %v300 = vsub.s32 0, %v299
  %v301 = vrot.slane %v296, %v300
  %v307 = vunpack.c.l.b16 %v292
  %v308 = vunpack.c.l.b16 %v293
  %v309 = vunpack.c.l.b16 %v294
  %v310 = vunpack.c.l.b16 %v295
  %v311 = vpack.c.b16 %v308, %v307
  %v312 = vpack.c.b16 %v310, %v309
  %vm315 = vcmask 261120
  %v317 = vsel %vm315, %v291, 0
  %319 = vmatprep.subr.bf16.mxu0 0
  %320 = vmatpush1.bf16.msra.mxu0 %v311
  %321 = vmatprep.subr.bf16.mxu0 0
  %322 = vmatpush1.bf16.msra.mxu0 %v312
  %323 = vmatprep.subr.bf16.mxu0 0
  %324 = vmatpush1.bf16.msra.mxu0 0
  %325 = vmatprep.subr.bf16.mxu0 0
  %326 = vmatpush1.bf16.msra.mxu0 0
  %327 = vmatprep.subr.bf16.mxu0 0
  %328 = vmatpush1.bf16.msra.mxu0 0
  %329 = vmatprep.subr.bf16.mxu0 0
  %330 = vmatpush1.bf16.msra.mxu0 0
  %331 = vmatprep.subr.bf16.mxu0 0
  %332 = vmatpush1.bf16.msra.mxu0 0
  %333 = vmatprep.subr.bf16.mxu0 0
  %334 = vmatpush1.bf16.msra.mxu0 0
  %335 = vmatprep.subr.bf16.mxu0 0
  %336 = vmatpush1.bf16.msra.mxu0 0
  %337 = vmatprep.subr.bf16.mxu0 0
  %338 = vmatpush1.bf16.msra.mxu0 0
  %339 = vmatprep.subr.bf16.mxu0 0
  %340 = vmatpush1.bf16.msra.mxu0 0
  %341 = vmatprep.subr.bf16.mxu0 0
  %342 = vmatpush1.bf16.msra.mxu0 0
  %343 = vmatprep.subr.bf16.mxu0 0
  %344 = vmatpush1.bf16.msra.mxu0 0
  %345 = vmatprep.subr.bf16.mxu0 0
  %346 = vmatpush1.bf16.msra.mxu0 0
  %347 = vmatprep.subr.bf16.mxu0 0
  %348 = vmatpush1.bf16.msra.mxu0 0
  %349 = vmatprep.subr.bf16.mxu0 0
  %350 = vmatpush1.bf16.msra.mxu0 0
  %351 = vmatprep.mubr.bf16.mxu0 0
  %352 = vmatmul.mubr.bf16.gmra.mrb[0].mxu0 %v317
  %v353 = vpop.f32.mrb[0].mxu0
  %v354 = vadd.f32 %v301, %v353
  %v355 = vpop.f32.mrb[0].mxu0
  %v356 = vpop.f32.mrb[0].mxu0
  %v357 = vadd.f32 %v301, %v356
  %v358 = vpop.f32.mrb[0].mxu0
  %359 = vdwg.mxu0
  %v360 = vmax.f32 %v354, 0.0
  %v361 = vmax.f32 %v357, 0.0
  %v362 = vpack.c.bf16 %v361, %v360
  %v363 = vld [vmem:[%s6] sm:$0xf]
  %v364 = vld [vmem:[%s6 + $0x4] sm:$0xf]
  %v365 = vld [vmem:[%s6 + $0x8] sm:$0xf]
  %v366 = vld [vmem:[%s6 + $0xc] sm:$0xf]
  %v367 = vld [vmem:[%s7] sm:$0x1]
  %v369 = vlaneseq
  %v370 = vshrl.u32 %v369, 7
  %v371 = vsub.s32 0, %v370
  %v372 = vrot.slane %v367, %v371
  %v378 = vunpack.c.l.b16 %v363
  %v379 = vunpack.c.l.b16 %v364
  %v380 = vunpack.c.l.b16 %v365
  %v381 = vunpack.c.l.b16 %v366
  %v382 = vpack.c.b16 %v379, %v378
  %v383 = vpack.c.b16 %v381, %v380
  %v387 = vsel %vm315, %v362, 0
  %389 = vmatprep.subr.bf16.mxu0 0
  %390 = vmatpush1.bf16.msra.mxu0 %v382
  %391 = vmatprep.subr.bf16.mxu0 0
  %392 = vmatpush1.bf16.msra.mxu0 %v383
  %393 = vmatprep.subr.bf16.mxu0 0
  %394 = vmatpush1.bf16.msra.mxu0 0
  %395 = vmatprep.subr.bf16.mxu0 0
  %396 = vmatpush1.bf16.msra.mxu0 0
  %397 = vmatprep.subr.bf16.mxu0 0
  %398 = vmatpush1.bf16.msra.mxu0 0
  %399 = vmatprep.subr.bf16.mxu0 0
  %400 = vmatpush1.bf16.msra.mxu0 0
  %401 = vmatprep.subr.bf16.mxu0 0
  %402 = vmatpush1.bf16.msra.mxu0 0
  %403 = vmatprep.subr.bf16.mxu0 0
  %404 = vmatpush1.bf16.msra.mxu0 0
  %405 = vmatprep.subr.bf16.mxu0 0
  %406 = vmatpush1.bf16.msra.mxu0 0
  %407 = vmatprep.subr.bf16.mxu0 0
  %408 = vmatpush1.bf16.msra.mxu0 0
  %409 = vmatprep.subr.bf16.mxu0 0
  %410 = vmatpush1.bf16.msra.mxu0 0
  %411 = vmatprep.subr.bf16.mxu0 0
  %412 = vmatpush1.bf16.msra.mxu0 0
  %413 = vmatprep.subr.bf16.mxu0 0
  %414 = vmatpush1.bf16.msra.mxu0 0
  %415 = vmatprep.subr.bf16.mxu0 0
  %416 = vmatpush1.bf16.msra.mxu0 0
  %417 = vmatprep.subr.bf16.mxu0 0
  %418 = vmatpush1.bf16.msra.mxu0 0
  %419 = vmatprep.subr.bf16.mxu0 0
  %420 = vmatpush1.bf16.msra.mxu0 0
  %421 = vmatprep.mubr.bf16.mxu0 0
  %422 = vmatmul.mubr.bf16.gmra.mrb[0].mxu0 %v387
  %v423 = vpop.f32.mrb[0].mxu0
  %v424 = vadd.f32 %v372, %v423
  %v425 = vpop.f32.mrb[0].mxu0
  %v426 = vpop.f32.mrb[0].mxu0
  %v427 = vadd.f32 %v372, %v426
  %v428 = vpop.f32.mrb[0].mxu0
  %429 = vdwg.mxu0
  %v430 = vpack.c.bf16 %v427, %v424
  %v432 = vunpack.c.l.b16 %v430
  %v433 = vunpack.c.h.b16 %v430
  %v434 = vpack.c.b16 %v432, %v432
  %v435 = vpack.c.b16 %v433, %v433
  %438 = vst [vmem:[%s8] sm:$0xf] %v434
  %439 = vst [vmem:[%s8 + $0x4] sm:$0xf] %v435
  %v440 = vld [vmem:[%s1] sm:$0xff]
  %v441 = vld [vmem:[%s1 + $0x8] sm:$0xff]
  %vm442 = vcmask 64512
  %v443 = vsel %vm442, %v424, -inf
  %444 = vmax.xlane.f32.xlu0 %v443
  %v445 = vpop.xlane.xlu0 %444
  %v446 = vsel %vm442, %v427, -inf
  %447 = vmax.xlane.f32.xlu0 %v446
  %v448 = vpop.xlane.xlu0 %447
  %v449 = vsub.f32 %v424, %v445
  %v450 = vsub.f32 %v427, %v448
  %v451 = vmul.f32 %v449, 1.442695
  %v452 = vpow.pop %v451
  %v453 = vmul.f32 %v450, 1.442695
  %v454 = vpow.pop %v453
  %v455 = vsel %vm442, %v452, 0.0
  %456 = vadd.xlane.f32.xlu0 %v455
  %v457 = vpop.xlane.xlu0 %456
  %v458 = vsel %vm442, %v454, 0.0
  %459 = vadd.xlane.f32.xlu0 %v458
  %v460 = vpop.xlane.xlu0 %459
  %v461 = vlog2.pop %v457
  %v462 = vmul.f32 %v461, 0.6931472
  %v463 = vlog2.pop %v460
  %v464 = vmul.f32 %v463, 0.6931472
  %v465 = vadd.f32 %v445, %v462
  %v466 = vadd.f32 %v448, %v464
  %v467 = vlaneseq
  %v468 = vand.u32 %v467, 127
  %469 = vset.pattern.permute.xlu0 0
  %470 = vperm.xlu0 %469, %v440
  %v471 = vpop.permute.xlu0 %470
  %472 = vset.pattern.permute.xlu0 0
  %473 = vperm.xlu0 %472, %v441
  %v474 = vpop.permute.xlu0 %473
  %vm475 = vcmp.eq.s32.totalorder %v468, %v471
  %vm476 = vcmp.eq.s32.totalorder %v468, %v474
  %v477 = vsel %vm475, %v424, 0.0
  %v478 = vsel %vm476, %v427, 0.0
  %v479 = vsel %vm442, %v477, 0.0
  %480 = vadd.xlane.f32.xlu0 %v479
  %v481 = vpop.xlane.xlu0 %480
  %v482 = vsel %vm442, %v478, 0.0
  %483 = vadd.xlane.f32.xlu0 %v482
  %v484 = vpop.xlane.xlu0 %483
  %vm485 = vcmp.ne.s32.totalorder %v440, 4294967295
  %vm486 = vcmp.ne.s32.totalorder %v441, 4294967295
  %v487 = vsub.f32 %v465, %v481
  %v488 = vsub.f32 %v466, %v484
  %v489 = vsel %vm485, %v487, 0.0
  %v490 = vsel %vm486, %v488, 0.0
  %vm491 = vcmp.eq.f32.partialorder %v424, %v445
  %vm492 = vcmp.eq.f32.partialorder %v427, %v448
  %v493 = vsel %vm491, %v468, 8
  %v494 = vsel %vm492, %v468, 8
  %v495 = vsel %vm442, %v493, 2147483647
  %v496 = vand.u32 %v495, 65535
  %v497 = vshra.s32 %v495, 16
  %v498 = vcvt.s32.f32 %v496
  %v499 = vcvt.s32.f32 %v497
  %500 = vmin.xlane.f32.xlu0 %v499
  %v501 = vpop.xlane.xlu0 %500
  %vm502 = vcmp.eq.f32.partialorder %v499, %v501
  %v503 = vsel %vm502, %v498, inf
  %504 = vmin.xlane.f32.xlu0 %v503
  %v505 = vpop.xlane.xlu0 %504
  %v506 = vcvt.f32.s32 %v505
  %v507 = vcvt.f32.s32 %v501
  %v508 = vshll.u32 %v507, 16
  %v509 = vadd.s32 %v508, %v506
  %v510 = vsel %vm442, %v494, 2147483647
  %v511 = vand.u32 %v510, 65535
  %v512 = vshra.s32 %v510, 16
  %v513 = vcvt.s32.f32 %v511
  %v514 = vcvt.s32.f32 %v512
  %515 = vmin.xlane.f32.xlu0 %v514
  %v516 = vpop.xlane.xlu0 %515
  %vm517 = vcmp.eq.f32.partialorder %v514, %v516
  %v518 = vsel %vm517, %v513, inf
  %519 = vmin.xlane.f32.xlu0 %v518
  %v520 = vpop.xlane.xlu0 %519
  %v521 = vcvt.f32.s32 %v520
  %v522 = vcvt.f32.s32 %v516
  %v523 = vshll.u32 %v522, 16
  %v524 = vadd.s32 %v523, %v521
  %vm525 = vcmp.eq.s32.totalorder %v509, %v440
  %vm526 = vcmp.eq.s32.totalorder %v524, %v441
  %vm527 = vmand %vm485, %vm525
  %vm528 = vmand %vm486, %vm526
  %v529 = vsel %vm527, 1.0, 0.0
  %v530 = vsel %vm528, 1.0, 0.0
  %vm531 = vcmask 7168
  %v532 = vsel %vm531, %v489, 0.0
  %v533 = vsel %vm531, %v490, 0.0
  %v534 = vadd.f32 %v532, %v533
  %535 = vadd.xlane.f32.xlu0 %v534
  %v536 = vpop.xlane.xlu0 %535
  %v537 = vrot.slane %v536, 4
  %v538 = vadd.f32 %v536, %v537
  %v539 = vrot.slane %v538, 2
  %v540 = vadd.f32 %v538, %v539
  %v541 = vrot.slane %v540, 1
  %v542 = vadd.f32 %v540, %v541
  %s543 = vtos %v542
  %v544 = vsel %vm485, 1, 0
  %v545 = vsel %vm486, 1, 0
  %v546 = vcvt.s32.f32 %v544
  %v547 = vcvt.s32.f32 %v545
  %v548 = vsel %vm531, %v546, 0.0
  %v549 = vsel %vm531, %v547, 0.0
  %v550 = vadd.f32 %v548, %v549
  %551 = vadd.xlane.f32.xlu0 %v550
  %v552 = vpop.xlane.xlu0 %551
  %v553 = vrot.slane %v552, 4
  %v554 = vadd.f32 %v552, %v553
  %v555 = vrot.slane %v554, 2
  %v556 = vadd.f32 %v554, %v555
  %v557 = vrot.slane %v556, 1
  %v558 = vadd.f32 %v556, %v557
  %s559 = vtos %v558
  %v560 = vsel %vm531, %v529, 0.0
  %v561 = vsel %vm531, %v530, 0.0
  %v562 = vadd.f32 %v560, %v561
  %563 = vadd.xlane.f32.xlu0 %v562
  %v564 = vpop.xlane.xlu0 %563
  %v565 = vrot.slane %v564, 4
  %v566 = vadd.f32 %v564, %v565
  %v567 = vrot.slane %v566, 2
  %v568 = vadd.f32 %v566, %v567
  %v569 = vrot.slane %v568, 1
  %v570 = vadd.f32 %v568, %v569
  %s571 = vtos %v570
  %v572 = vlaneseq
  %v573 = vshrl.u32 %v572, 7
  %vm574 = vcmp.eq.s32.totalorder %v573, 0
  %vm575 = vcmp.eq.s32.totalorder %v468, 0
  %vm576 = vmand %vm574, %vm575
  %v577 = vstv %s543
  %v578 = vsel %vm576, %v577, 0.0
  %vm579 = vcmp.eq.s32.totalorder %v468, 1
  %vm580 = vmand %vm574, %vm579
  %v581 = vstv %s559
  %v582 = vsel %vm580, %v581, 0.0
  %v583 = vadd.f32 %v578, %v582
  %vm584 = vcmp.eq.s32.totalorder %v468, 2
  %vm585 = vmand %vm574, %vm584
  %v586 = vstv %s571
  %v587 = vsel %vm585, %v586, 0.0
  %v588 = vadd.f32 %v583, %v587
  %589 = vst [vmem:[%s9] sm:$0xff] %v588
  // Predicated region
  $region34: #{seq_baseline_forward.1} parent=0 // pred_check
    _
  $region35: #{seq_baseline_forward.1} parent=0 // pred_check_branch
    %591 = sbr.rel (0) target = $region37
  $region36: #{seq_baseline_forward.1} parent=0 // pred_region
    _
  $region37: #{seq_baseline_forward.1} parent=0 // pred_fallthru
    _
  // Predicated region
  $region38: #{seq_baseline_forward.1} parent=0 // pred_check
    _
  $region39: #{seq_baseline_forward.1} parent=0 // pred_check_branch
    %593 = sbr.rel (0) target = $region41
  $region40: #{seq_baseline_forward.1} parent=0 // pred_region
    _
  $region41: #{seq_baseline_forward.1} parent=0 // pred_fallthru
    _
  // Predicated region
  $region42: #{seq_baseline_forward.1} parent=0 // pred_check
    _
  $region43: #{seq_baseline_forward.1} parent=0 // pred_check_branch
    %595 = sbr.rel (0) target = $region45
  $region44: #{seq_baseline_forward.1} parent=0 // pred_region
    _
  $region45: #{seq_baseline_forward.1} parent=0 // pred_fallthru
    _
  // Predicated region
  $region46: #{seq_baseline_forward.1} parent=0 // pred_check
    _
  $region47: #{seq_baseline_forward.1} parent=0 // pred_check_branch
    %597 = sbr.rel (0) target = $region49
  $region48: #{seq_baseline_forward.1} parent=0 // pred_region
    _
  $region49: #{seq_baseline_forward.1} parent=0 // pred_fallthru
    _

</llo_original>
